<compile_context>
chip_gen: v5e
topology: v5e:2x2
jax: 0.10.0
libtpu: 0.0.40
codegen_flags: <defaults>
</compile_context>

<pallas_src>
import functools

import jax
import jax.numpy as jnp
from jax.experimental import pallas as pl
from jax.experimental.pallas import tpu as pltpu


# ---------------------------------------------------------------------------
# Fused MHA kernel: one batch element per grid step, all heads batched inside.
# ---------------------------------------------------------------------------
def _mha_kernel(x_ref, wqkv_ref, wout_ref, bias_ref,   # inputs
                out_ref, attn_ref=None,                # outputs
                *, n_head, d_k):
    x_b = x_ref[0]                                     # (S, d_model)
    S, d_model = x_b.shape

    # Head-batched QKV projection. wqkv_ref is (H, d_model, 3*d_k) with the
    # 1/sqrt(d_k) scale already folded into the Q columns.
    x_h = jnp.broadcast_to(x_b[None], (n_head, S, d_model))
    qkv = jnp.einsum('hsm,hmn->hsn', x_h, wqkv_ref[...],
                     preferred_element_type=jnp.float32)        # (H, S, 3*d_k)
    q = qkv[:, :, :d_k]
    k = qkv[:, :, d_k:2 * d_k]
    v = qkv[:, :, 2 * d_k:]

    # Batched scores + bias, then ONE vectorized softmax over all heads.
    # Exact reciprocal (approx=False) keeps attn within the 1e-5 tolerance.
    s = jnp.einsum('hqd,hkd->hqk', q, k,
                   preferred_element_type=jnp.float32) + bias_ref[...]  # (H,S,S)
    m = jnp.max(s, axis=-1, keepdims=True)
    e = jnp.exp(s - m)
    l = jnp.sum(e, axis=-1, keepdims=True)
    p = e * pl.reciprocal(l)                                            # (H,S,S)

    # TODO(synk): nn.Dropout on attn is identity in eval mode; no-op.
    if attn_ref is not None:
        attn_ref[...] = p[None].astype(attn_ref.dtype)   # single block store

    # Batched attention context; never leaves vregs (no VMEM scratch).
    ctx = jnp.einsum('hqk,hkd->hqd', p, v,
                     preferred_element_type=jnp.float32)         # (H, S, d_k)

    # Output projection: out = sum_h ctx[h] @ w_out[h*d_k:(h+1)*d_k, :],
    # expressed as a head-batched matmul + reduction over heads.
    out_h = jnp.einsum('hsd,hdn->hsn', ctx, wout_ref[...],
                       preferred_element_type=jnp.float32)       # (H, S, d_model)
    out_ref[...] = jnp.sum(out_h, axis=0, keepdims=True).astype(out_ref.dtype)


# ---------------------------------------------------------------------------
# MultiHeadAttention forward (single pallas_call, grid over batch)
# ---------------------------------------------------------------------------
def multi_head_attention(x, bias, params, n_head, *, return_attn=True):
    """
    x:    (B, S, d_model)
    bias: (n_head, S, S)   (broadcast over batch, like bias.unsqueeze(0))
    params: w_q, w_k, w_v: (d_model, d_key) == W_torch.T ; w_out: (d_key, d_model)
    Returns (output (B, S, d_model), attn_weight (B, n_head, S, S) or None).
    """
    B, S, d_model = x.shape
    d_key = params["w_q"].shape[1]
    d_k = d_key // n_head
    inv_scale = 1.0 / (float(d_k) ** 0.5)

    # One-time weight relayout (constant-folded under jit):
    #   (d_model, d_key) -> (H, d_model, d_k); fold 1/sqrt(d_k) into Q;
    #   concat Q/K/V along the last dim -> (H, d_model, 3*d_k).
    def per_head(w):
        return jnp.transpose(w.reshape(d_model, n_head, d_k), (1, 0, 2))

    w_qkv = jnp.concatenate(
        [per_head(params["w_q"]) * inv_scale,
         per_head(params["w_k"]),
         per_head(params["w_v"])], axis=-1).astype(jnp.float32)  # (H, d_model, 3*d_k)
    w_out = params["w_out"].reshape(n_head, d_k, d_model).astype(jnp.float32)

    flops = (2 * B * n_head * S * d_model * 3 * d_k        # QKV projection
             + 2 * B * n_head * S * S * d_k                 # scores
             + 2 * B * n_head * S * S * d_k                 # context
             + 2 * B * n_head * S * d_k * d_model)          # output projection
    bytes_accessed = 4 * (x.size + w_qkv.size + w_out.size + bias.size
                          + B * S * d_model
                          + (B * n_head * S * S if return_attn else 0))
    cost = pl.CostEstimate(flops=flops,
                           transcendentals=B * n_head * S * S,
                           bytes_accessed=bytes_accessed)

    out_sds = jax.ShapeDtypeStruct((B, S, d_model), jnp.float32)
    attn_sds = jax.ShapeDtypeStruct((B, n_head, S, S), jnp.float32)
    out_spec = pl.BlockSpec((1, S, d_model), lambda b: (b, 0, 0))
    attn_spec = pl.BlockSpec((1, n_head, S, S), lambda b: (b, 0, 0, 0))

    kernel = functools.partial(_mha_kernel, n_head=n_head, d_k=d_k)

    res = pl.pallas_call(
        kernel,
        out_shape=(out_sds, attn_sds) if return_attn else out_sds,
        grid=(B,),
        in_specs=[
            pl.BlockSpec((1, S, d_model), lambda b: (b, 0, 0)),
            pl.BlockSpec((n_head, d_model, 3 * d_k), lambda b: (0, 0, 0)),
            pl.BlockSpec((n_head, d_k, d_model), lambda b: (0, 0, 0)),
            pl.BlockSpec((n_head, S, S), lambda b: (0, 0, 0)),
        ],
        out_specs=(out_spec, attn_spec) if return_attn else out_spec,
        compiler_params=pltpu.CompilerParams(
            dimension_semantics=("parallel",)),
        cost_estimate=cost,
    )(x.astype(jnp.float32), w_qkv, w_out, bias.astype(jnp.float32))

    if return_attn:
        out, attn = res
    else:
        out, attn = res, None
    # TODO(synk): trailing nn.Dropout is identity in eval mode; no-op here.
    return out.astype(x.dtype), attn


# ---------------------------------------------------------------------------
if __name__ == "__main__":
    # Small shapes consistent with the module's forward.
    B, S = 2, 8
    d_model, d_key, n_head = 32, 32, 4

    key = jax.random.PRNGKey(0)
    kx, kb, k1, k2, k3, k4 = jax.random.split(key, 6)

    x = jax.random.normal(kx, (B, S, d_model), dtype=jnp.float32)
    bias = 0.1 * jax.random.normal(kb, (n_head, S, S), dtype=jnp.float32)

    # Parameters stored transposed: (in, out) == W_torch.T.
    params = {
        "w_q": 0.05 * jax.random.normal(k1, (d_model, d_key), dtype=jnp.float32),
        "w_k": 0.05 * jax.random.normal(k2, (d_model, d_key), dtype=jnp.float32),
        "w_v": 0.05 * jax.random.normal(k3, (d_model, d_key), dtype=jnp.float32),
        "w_out": 0.05 * jax.random.normal(k4, (d_key, d_model), dtype=jnp.float32),
    }

    out, attn = multi_head_attention(x, bias, params, n_head)
    out = jax.block_until_ready(out)
    attn = jax.block_until_ready(attn)

    assert out.shape == (B, S, d_model)
    assert attn.shape == (B, n_head, S, S)

    # Reference check in plain JAX.
    def ref_forward(x, bias, p):
        d_k = d_key // n_head
        q = (x.reshape(B * S, d_model) @ p["w_q"]).reshape(B, S, n_head, d_k).transpose(0, 2, 1, 3)
        k = (x.reshape(B * S, d_model) @ p["w_k"]).reshape(B, S, n_head, d_k).transpose(0, 2, 1, 3)
        v = (x.reshape(B * S, d_model) @ p["w_v"]).reshape(B, S, n_head, d_k).transpose(0, 2, 1, 3)
        a = jnp.einsum("bhqd,bhkd->bhqk", q / (d_k ** 0.5), k) + bias[None]
        a = jax.nn.softmax(a, axis=-1)
        c = jnp.einsum("bhqk,bhkd->bhqd", a, v)
        c = c.transpose(0, 2, 1, 3).reshape(B * S, d_key)
        return (c @ p["w_out"]).reshape(B, S, d_model), a

    ref_out, ref_attn = ref_forward(x, bias, params)
    assert jnp.allclose(out, ref_out, atol=1e-4, rtol=1e-4)
    assert jnp.allclose(attn, ref_attn, atol=1e-5, rtol=1e-5)

    print("KERNEL_OK")
</pallas_src>

<mosaic_0001>
module attributes {stable_mosaic.version = 11 : i64} {
  func.func @_mha_kernel(%arg0: i32, %arg1: memref<1x8x32xf32, #tpu.memory_space<vmem>>, %arg2: memref<4x32x24xf32, #tpu.memory_space<vmem>>, %arg3: memref<4x8x32xf32, #tpu.memory_space<vmem>>, %arg4: memref<4x8x8xf32, #tpu.memory_space<vmem>>, %arg5: memref<1x8x32xf32, #tpu.memory_space<vmem>>, %arg6: memref<1x4x8x8xf32, #tpu.memory_space<vmem>>) attributes {dimension_semantics = [#tpu.dimension_semantics<parallel>], iteration_bounds = array<i64: 2>, scalar_prefetch = 0 : i64, scratch_operands = 0 : i64, tpu.core_type = #tpu.core_type<tc>, window_params = [{transform_indices = @transform_0, window_bounds = array<i64: 1, 8, 32>}, {pipeline_mode = #tpu.pipeline_mode<synchronous>, transform_indices = @transform_1, window_bounds = array<i64: 4, 32, 24>}, {pipeline_mode = #tpu.pipeline_mode<synchronous>, transform_indices = @transform_2, window_bounds = array<i64: 4, 8, 32>}, {pipeline_mode = #tpu.pipeline_mode<synchronous>, transform_indices = @transform_3, window_bounds = array<i64: 4, 8, 8>}, {transform_indices = @transform_4, window_bounds = array<i64: 1, 8, 32>}, {transform_indices = @transform_5, window_bounds = array<i64: 1, 4, 8, 8>}]} {
    %c0 = arith.constant 0 : index
    %c0_0 = arith.constant 0 : index
    %c0_1 = arith.constant 0 : index
    %0 = vector.load %arg1[%c0, %c0_0, %c0_1] : memref<1x8x32xf32, #tpu.memory_space<vmem>>, vector<1x8x32xf32>
    %1 = vector.shape_cast %0 : vector<1x8x32xf32> to vector<8x32xf32>
    %2 = vector.shape_cast %1 : vector<8x32xf32> to vector<1x8x32xf32>
    %3 = vector.shape_cast %2 : vector<1x8x32xf32> to vector<1x8x32xf32>
    %4 = vector.broadcast %3 : vector<1x8x32xf32> to vector<4x8x32xf32>
    %c0_2 = arith.constant 0 : index
    %c0_3 = arith.constant 0 : index
    %c0_4 = arith.constant 0 : index
    %5 = vector.load %arg2[%c0_2, %c0_3, %c0_4] : memref<4x32x24xf32, #tpu.memory_space<vmem>>, vector<4x32x24xf32>
    "tpu.trace_start"() <{level = 10 : i32, message = "hsm,hmn->hsn"}> : () -> ()
    %cst = arith.constant dense<0.000000e+00> : vector<4x8x24xf32>
    %6 = tpu.matmul %4, %5, %cst {dimension_numbers = #tpu.dot_dimension_numbers<[2], [1], [1], [2], [0, 0, 0, 1, 1, 2], [0], [0]>} : vector<4x8x32xf32>, vector<4x32x24xf32>, vector<4x8x24xf32> -> vector<4x8x24xf32>
    "tpu.trace_stop"() : () -> ()
    %7 = vector.extract_strided_slice %6 {offsets = [0, 0, 0], sizes = [4, 8, 8], strides = [1, 1, 1]} : vector<4x8x24xf32> to vector<4x8x8xf32>
    %8 = vector.extract_strided_slice %6 {offsets = [0, 0, 8], sizes = [4, 8, 8], strides = [1, 1, 1]} : vector<4x8x24xf32> to vector<4x8x8xf32>
    %9 = vector.extract_strided_slice %6 {offsets = [0, 0, 16], sizes = [4, 8, 8], strides = [1, 1, 1]} : vector<4x8x24xf32> to vector<4x8x8xf32>
    "tpu.trace_start"() <{level = 10 : i32, message = "hqd,hkd->hqk"}> : () -> ()
    %cst_5 = arith.constant dense<0.000000e+00> : vector<4x8x8xf32>
    %10 = tpu.matmul %7, %8, %cst_5 {dimension_numbers = #tpu.dot_dimension_numbers<[2], [2], [1], [1], [0, 0, 0, 1, 1, 1], [0], [0]>} : vector<4x8x8xf32>, vector<4x8x8xf32>, vector<4x8x8xf32> -> vector<4x8x8xf32>
    "tpu.trace_stop"() : () -> ()
    %c0_6 = arith.constant 0 : index
    %c0_7 = arith.constant 0 : index
    %c0_8 = arith.constant 0 : index
    %11 = vector.load %arg4[%c0_6, %c0_7, %c0_8] : memref<4x8x8xf32, #tpu.memory_space<vmem>>, vector<4x8x8xf32>
    %12 = arith.addf %10, %11 : vector<4x8x8xf32>
    %cst_9 = arith.constant dense<0xFF800000> : vector<4x8xf32>
    %13 = vector.multi_reduction <maximumf>, %12, %cst_9 [2] : vector<4x8x8xf32> to vector<4x8xf32>
    %14 = vector.shape_cast %13 : vector<4x8xf32> to vector<4x8x1xf32>
    %15 = vector.broadcast %14 : vector<4x8x1xf32> to vector<4x8x8xf32>
    %16 = arith.subf %12, %15 : vector<4x8x8xf32>
    %17 = math.exp %16 : vector<4x8x8xf32>
    %cst_10 = arith.constant dense<0.000000e+00> : vector<4x8xf32>
    %18 = vector.multi_reduction <add>, %17, %cst_10 [2] : vector<4x8x8xf32> to vector<4x8xf32>
    %19 = vector.shape_cast %18 : vector<4x8xf32> to vector<4x8x1xf32>
    %20 = tpu.reciprocal %19 : vector<4x8x1xf32> -> vector<4x8x1xf32>
    %21 = vector.broadcast %20 : vector<4x8x1xf32> to vector<4x8x8xf32>
    %22 = arith.mulf %17, %21 : vector<4x8x8xf32>
    %23 = vector.shape_cast %22 : vector<4x8x8xf32> to vector<1x4x8x8xf32>
    %c0_11 = arith.constant 0 : index
    %c0_12 = arith.constant 0 : index
    %c0_13 = arith.constant 0 : index
    %c0_14 = arith.constant 0 : index
    %24 = vector.load %arg6[%c0_11, %c0_12, %c0_13, %c0_14] : memref<1x4x8x8xf32, #tpu.memory_space<vmem>>, vector<1x4x8x8xf32>
    tpu.vector_store %arg6[%c0_11, %c0_12, %c0_13, %c0_14], %23 {strides = array<i32>} : memref<1x4x8x8xf32, #tpu.memory_space<vmem>>, vector<1x4x8x8xf32>,
    "tpu.trace_start"() <{level = 10 : i32, message = "hqk,hkd->hqd"}> : () -> ()
    %cst_15 = arith.constant dense<0.000000e+00> : vector<4x8x8xf32>
    %25 = tpu.matmul %22, %9, %cst_15 {dimension_numbers = #tpu.dot_dimension_numbers<[2], [1], [1], [2], [0, 0, 0, 1, 1, 2], [0], [0]>} : vector<4x8x8xf32>, vector<4x8x8xf32>, vector<4x8x8xf32> -> vector<4x8x8xf32>
    "tpu.trace_stop"() : () -> ()
    %c0_16 = arith.constant 0 : index
    %c0_17 = arith.constant 0 : index
    %c0_18 = arith.constant 0 : index
    %26 = vector.load %arg3[%c0_16, %c0_17, %c0_18] : memref<4x8x32xf32, #tpu.memory_space<vmem>>, vector<4x8x32xf32>
    "tpu.trace_start"() <{level = 10 : i32, message = "hsd,hdn->hsn"}> : () -> ()
    %cst_19 = arith.constant dense<0.000000e+00> : vector<4x8x32xf32>
    %27 = tpu.matmul %25, %26, %cst_19 {dimension_numbers = #tpu.dot_dimension_numbers<[2], [1], [1], [2], [0, 0, 0, 1, 1, 2], [0], [0]>} : vector<4x8x8xf32>, vector<4x8x32xf32>, vector<4x8x32xf32> -> vector<4x8x32xf32>
    "tpu.trace_stop"() : () -> ()
    %cst_20 = arith.constant dense<0.000000e+00> : vector<8x32xf32>
    %28 = vector.multi_reduction <add>, %27, %cst_20 [0] : vector<4x8x32xf32> to vector<8x32xf32>
    %29 = vector.shape_cast %28 : vector<8x32xf32> to vector<1x8x32xf32>
    %c0_21 = arith.constant 0 : index
    %c0_22 = arith.constant 0 : index
    %c0_23 = arith.constant 0 : index
    %30 = vector.load %arg5[%c0_21, %c0_22, %c0_23] : memref<1x8x32xf32, #tpu.memory_space<vmem>>, vector<1x8x32xf32>
    tpu.vector_store %arg5[%c0_21, %c0_22, %c0_23], %29 {strides = array<i32>} : memref<1x8x32xf32, #tpu.memory_space<vmem>>, vector<1x8x32xf32>,
    return
  }
  func.func @transform_0(%arg0: i32) -> (i32, i32, i32) {
    %c0_i32 = arith.constant 0 : i32
    %c0_i32_0 = arith.constant 0 : i32
    %c0_i32_1 = arith.constant 0 : i32
    return %arg0, %c0_i32, %c0_i32_0 : i32, i32, i32
  }
  func.func @transform_1(%arg0: i32) -> (i32, i32, i32) {
    %c0_i32 = arith.constant 0 : i32
    %c0_i32_0 = arith.constant 0 : i32
    %c0_i32_1 = arith.constant 0 : i32
    %c0_i32_2 = arith.constant 0 : i32
    return %c0_i32, %c0_i32_0, %c0_i32_1 : i32, i32, i32
  }
  func.func @transform_2(%arg0: i32) -> (i32, i32, i32) {
    %c0_i32 = arith.constant 0 : i32
    %c0_i32_0 = arith.constant 0 : i32
    %c0_i32_1 = arith.constant 0 : i32
    %c0_i32_2 = arith.constant 0 : i32
    return %c0_i32, %c0_i32_0, %c0_i32_1 : i32, i32, i32
  }
  func.func @transform_3(%arg0: i32) -> (i32, i32, i32) {
    %c0_i32 = arith.constant 0 : i32
    %c0_i32_0 = arith.constant 0 : i32
    %c0_i32_1 = arith.constant 0 : i32
    %c0_i32_2 = arith.constant 0 : i32
    return %c0_i32, %c0_i32_0, %c0_i32_1 : i32, i32, i32
  }
  func.func @transform_4(%arg0: i32) -> (i32, i32, i32) {
    %c0_i32 = arith.constant 0 : i32
    %c0_i32_0 = arith.constant 0 : i32
    %c0_i32_1 = arith.constant 0 : i32
    return %arg0, %c0_i32, %c0_i32_0 : i32, i32, i32
  }
  func.func @transform_5(%arg0: i32) -> (i32, i32, i32, i32) {
    %c0_i32 = arith.constant 0 : i32
    %c0_i32_0 = arith.constant 0 : i32
    %c0_i32_1 = arith.constant 0 : i32
    %c0_i32_2 = arith.constant 0 : i32
    return %arg0, %c0_i32, %c0_i32_0, %c0_i32_1 : i32, i32, i32, i32
  }
}

</mosaic_0001>

<llo_original>
// kernel: tpu_custom_call.1
$region0: #{tpu_custom_call.1}
  #allocation0 [shape = 'u32[]', space=smem, size = 0x4, offset = 0x4, fixed_abs, tag = 'smem constant byte address 0x4 - core index']
  #allocation1 [shape = 'u32[72,128]{1,0:T(1,128)}', space=vmem, size = 0x9000, scoped, tag = 'internal scratch']
  %s0 = inlined_call_operand.vmem [shape: f32[2,8,32], index: 0, kind: input, shape index: {}]
  %s1 = inlined_call_operand.vmem [shape: f32[4,32,24], index: 1, kind: input, shape index: {}]
  %s2 = inlined_call_operand.vmem [shape: f32[4,8,32], index: 2, kind: input, shape index: {}]
  %s3 = inlined_call_operand.vmem [shape: f32[4,8,8], index: 3, kind: input, shape index: {}]
  %s4 = inlined_call_operand.hbm [shape: f32[2,8,32], index: 4, kind: output, shape index: {0}]
  %s5 = inlined_call_operand.hbm [shape: f32[2,4,8,8], index: 5, kind: output, shape index: {1}]
  %6 = xla_tuple %s4, %s5
  %s7 = sld [smem:[#allocation0]]
  $region57: #{tpu_custom_call.1} parent=0
    _
  %s9 = ssub.s32 1, %s7
  %s10 = scalar_select 0, %s9, %s7
  $region1: #{tpu_custom_call.1} parent=0
    #allocation2 [shape = 'u8[8192]{0}', space=vmem, size = 0x2000, scoped, tag = 'output window, operand 0']
    #allocation3 [shape = 's32[2]{0}', space=sflag, size = 0x8, scoped, tag = 'scoped memory for tpu_custom_call.1']
    #allocation4 [shape = 'u8[32768]{0}', space=vmem, size = 0x8000, scoped, tag = 'output window, operand 1']
    #allocation5 [shape = 's32[2]{0}', space=sflag, size = 0x8, scoped, tag = 'scoped memory for tpu_custom_call.1']
    %11 = vsyncpa [#allocation3], 0
    %s12 = scalar_lea.sflag [#allocation3], 1
    %13 = vsyncpa %s12, 0
    %14 = vsyncpa [#allocation5], 0
    %s15 = scalar_lea.sflag [#allocation5], 1
    %16 = vsyncpa %s15, 0
    loop: start=0, step=1, limit=4
    $region2: #{tpu_custom_call.1} parent=1 // loop_pre_header
      _
    $region3: #{tpu_custom_call.1} parent=1 // loop_header
      %s18 = sphi 0, %s22
      %p19 = scmp.ge.s32.totalorder %s18, 4
      %s28 = sphi 0, %s30
      %s31 = sphi 0, %s28
      %s32 = sphi 0, %s31
      %s48 = sphi 0, %s32
      %s52 = sphi 0, %s52
      %s54 = sphi 0, %s52
      %s55 = sphi 0, %s54
      %s69 = sphi 0, %s55
      %s73 = sphi 0, %s73
      %s75 = sphi 0, %s73
      %s76 = sphi 0, %s75
      %s90 = sphi 0, %s76
      %s94 = sphi 0, %s94
      %s96 = sphi 0, %s94
      %s97 = sphi 0, %s96
      %s111 = sphi 0, %s97
      %s117 = sphi 0, %s119
      %s120 = sphi 0, %s117
      %s121 = sphi 0, %s120
      %s137 = sphi 0, %s121
      %s143 = sphi 0, %s145
      %s146 = sphi 0, %s143
      %s147 = sphi 0, %s146
      %s163 = sphi 0, %s147
    $region4: #{tpu_custom_call.1} parent=1 // loop_header_branch
      %21 = sbr.rel (%p19) target = $region8
    $region5: #{tpu_custom_call.1} parent=1 // loop_body
      %s23 = ssub.s32 %s18, 1
      %s24 = ssub.s32 %s18, 2
      %s25 = sadd.s32 %s18, 1
      %s26 = ssub.s32 %s18, %s25
      %p27 = scmp.eq.s32.totalorder %s26, 0
      %s29 = sadd.s32 %s28, 1
      %s30 = scalar_select %p27, %s28, %s29
      %p33 = pneg %p27
      %p34 = scmp.eq.s32.totalorder %s18, 1
      %p35 = por %p33, %p34
      %p36 = scmp.ne.s32.totalorder %s28, %s31
      %p37 = scmp.eq.s32.totalorder %s18, 0
      %p38 = por %p36, %p37
      %p39 = scmp.ne.s32.totalorder %s28, %s31
      %p40 = scmp.eq.s32.totalorder %s23, 1
      %p41 = por %p39, %p40
      %p42 = scmp.ne.s32.totalorder %s31, %s32
      %p43 = scmp.eq.s32.totalorder %s23, 0
      %p44 = por %p42, %p43
      %p45 = scmp.ne.s32.totalorder %s31, %s32
      %p46 = scmp.eq.s32.totalorder %s24, 1
      %p47 = por %p45, %p46
      %p49 = scmp.ne.s32.totalorder %s32, %s48
      %p50 = scmp.eq.s32.totalorder %s24, 0
      %p51 = por %p49, %p50
      %s53 = sadd.s32 %s52, 1
      %p56 = scmp.eq.s32.totalorder %s18, 1
      %p57 = scmp.ne.s32.totalorder %s52, %s54
      %p58 = scmp.eq.s32.totalorder %s18, 0
      %p59 = por %p57, %p58
      %p60 = scmp.ne.s32.totalorder %s52, %s54
      %p61 = scmp.eq.s32.totalorder %s23, 1
      %p62 = por %p60, %p61
      %p63 = scmp.ne.s32.totalorder %s54, %s55
      %p64 = scmp.eq.s32.totalorder %s23, 0
      %p65 = por %p63, %p64
      %p66 = scmp.ne.s32.totalorder %s54, %s55
      %p67 = scmp.eq.s32.totalorder %s24, 1
      %p68 = por %p66, %p67
      %p70 = scmp.ne.s32.totalorder %s55, %s69
      %p71 = scmp.eq.s32.totalorder %s24, 0
      %p72 = por %p70, %p71
      %s74 = sadd.s32 %s73, 1
      %p77 = scmp.eq.s32.totalorder %s18, 1
      %p78 = scmp.ne.s32.totalorder %s73, %s75
      %p79 = scmp.eq.s32.totalorder %s18, 0
      %p80 = por %p78, %p79
      %p81 = scmp.ne.s32.totalorder %s73, %s75
      %p82 = scmp.eq.s32.totalorder %s23, 1
      %p83 = por %p81, %p82
      %p84 = scmp.ne.s32.totalorder %s75, %s76
      %p85 = scmp.eq.s32.totalorder %s23, 0
      %p86 = por %p84, %p85
      %p87 = scmp.ne.s32.totalorder %s75, %s76
      %p88 = scmp.eq.s32.totalorder %s24, 1
      %p89 = por %p87, %p88
      %p91 = scmp.ne.s32.totalorder %s76, %s90
      %p92 = scmp.eq.s32.totalorder %s24, 0
      %p93 = por %p91, %p92
      %s95 = sadd.s32 %s94, 1
      %p98 = scmp.eq.s32.totalorder %s18, 1
      %p99 = scmp.ne.s32.totalorder %s94, %s96
      %p100 = scmp.eq.s32.totalorder %s18, 0
      %p101 = por %p99, %p100
      %p102 = scmp.ne.s32.totalorder %s94, %s96
      %p103 = scmp.eq.s32.totalorder %s23, 1
      %p104 = por %p102, %p103
      %p105 = scmp.ne.s32.totalorder %s96, %s97
      %p106 = scmp.eq.s32.totalorder %s23, 0
      %p107 = por %p105, %p106
      %p108 = scmp.ne.s32.totalorder %s96, %s97
      %p109 = scmp.eq.s32.totalorder %s24, 1
      %p110 = por %p108, %p109
      %p112 = scmp.ne.s32.totalorder %s97, %s111
      %p113 = scmp.eq.s32.totalorder %s24, 0
      %p114 = por %p112, %p113
      %s115 = ssub.s32 %s18, %s25
      %p116 = scmp.eq.s32.totalorder %s115, 0
      %s118 = sadd.s32 %s117, 1
      %s119 = scalar_select %p116, %s117, %s118
      %p122 = pneg %p116
      %p123 = scmp.eq.s32.totalorder %s18, 1
      %p124 = por %p122, %p123
      %p125 = scmp.ne.s32.totalorder %s117, %s120
      %p126 = scmp.eq.s32.totalorder %s18, 0
      %p127 = por %p125, %p126
      %p128 = scmp.ne.s32.totalorder %s117, %s120
      %p129 = scmp.eq.s32.totalorder %s23, 1
      %p130 = por %p128, %p129
      %p131 = scmp.ne.s32.totalorder %s120, %s121
      %p132 = scmp.eq.s32.totalorder %s23, 0
      %p133 = por %p131, %p132
      %p134 = scmp.ne.s32.totalorder %s120, %s121
      %p135 = scmp.eq.s32.totalorder %s24, 1
      %p136 = por %p134, %p135
      %p138 = scmp.ne.s32.totalorder %s121, %s137
      %p139 = scmp.eq.s32.totalorder %s24, 0
      %p140 = por %p138, %p139
      %s141 = ssub.s32 %s18, %s25
      %p142 = scmp.eq.s32.totalorder %s141, 0
      %s144 = sadd.s32 %s143, 1
      %s145 = scalar_select %p142, %s143, %s144
      %p148 = pneg %p142
      %p149 = scmp.eq.s32.totalorder %s18, 1
      %p150 = por %p148, %p149
      %p151 = scmp.ne.s32.totalorder %s143, %s146
      %p152 = scmp.eq.s32.totalorder %s18, 0
      %p153 = por %p151, %p152
      %p154 = scmp.ne.s32.totalorder %s143, %s146
      %p155 = scmp.eq.s32.totalorder %s23, 1
      %p156 = por %p154, %p155
      %p157 = scmp.ne.s32.totalorder %s146, %s147
      %p158 = scmp.eq.s32.totalorder %s23, 0
      %p159 = por %p157, %p158
      %p160 = scmp.ne.s32.totalorder %s146, %s147
      %p161 = scmp.eq.s32.totalorder %s24, 1
      %p162 = por %p160, %p161
      %p164 = scmp.ne.s32.totalorder %s147, %s163
      %p165 = scmp.eq.s32.totalorder %s24, 0
      %p166 = por %p164, %p165
      %p167 = scmp.le.s32.totalorder 1, %s18
      %p168 = scmp.lt.s32.totalorder %s18, 3
      %p169 = pnand %p167, %p168
      %p170 = pneg %p169
      // Predicated region
      $region9: #{tpu_custom_call.1} parent=5 // pred_check
        _
      $region10: #{tpu_custom_call.1} parent=5 // pred_check_branch
        %172 = sbr.rel (%p169) target = $region12
      $region11: #{tpu_custom_call.1} parent=5 // pred_region
        %s173 = ssub.s32 %s18, 1
        // Predicated region
        $region13: #{tpu_custom_call.1} parent=11 // pred_check
          %p174 = pneg %p65
        $region14: #{tpu_custom_call.1} parent=11 // pred_check_branch
          %176 = sbr.rel (%p174) target = $region16
        $region15: #{tpu_custom_call.1} parent=11 // pred_region
          _
        $region16: #{tpu_custom_call.1} parent=11 // pred_fallthru
          _
        // Predicated region
        $region17: #{tpu_custom_call.1} parent=11 // pred_check
          %p177 = pneg %p86
        $region18: #{tpu_custom_call.1} parent=11 // pred_check_branch
          %179 = sbr.rel (%p177) target = $region20
        $region19: #{tpu_custom_call.1} parent=11 // pred_region
          _
        $region20: #{tpu_custom_call.1} parent=11 // pred_fallthru
          _
        // Predicated region
        $region21: #{tpu_custom_call.1} parent=11 // pred_check
          %p180 = pneg %p107
        $region22: #{tpu_custom_call.1} parent=11 // pred_check_branch
          %182 = sbr.rel (%p180) target = $region24
        $region23: #{tpu_custom_call.1} parent=11 // pred_region
          _
        $region24: #{tpu_custom_call.1} parent=11 // pred_fallthru
          _
      $region12: #{tpu_custom_call.1} parent=5 // pred_fallthru
        _
      %p183 = scmp.lt.s32.totalorder %s18, 2
      // Predicated region
      $region25: #{tpu_custom_call.1} parent=5 // pred_check
        %p184 = pneg %p183
      $region26: #{tpu_custom_call.1} parent=5 // pred_check_branch
        %186 = sbr.rel (%p184) target = $region28
      $region27: #{tpu_custom_call.1} parent=5 // pred_region
        // Predicated region
        $region29: #{tpu_custom_call.1} parent=27 // pred_check
          %p187 = pneg %p38
        $region30: #{tpu_custom_call.1} parent=27 // pred_check_branch
          %189 = sbr.rel (%p187) target = $region32
        $region31: #{tpu_custom_call.1} parent=27 // pred_region
          %p190 = scmp.lt.s32.totalorder %s18, 1
          %s191 = scalar_select %p190, %s18, 1
          %s192 = smul.addr %s191, 8
          %s193 = scalar_lea.vmem %s0, %s192
        $region32: #{tpu_custom_call.1} parent=27 // pred_fallthru
          _
      $region28: #{tpu_custom_call.1} parent=5 // pred_fallthru
        _
      %p194 = scmp.le.s32.totalorder 1, %s18
      %p195 = scmp.lt.s32.totalorder %s18, 3
      %p196 = pnand %p194, %p195
      %p197 = pneg %p196
      // Predicated region
      $region33: #{tpu_custom_call.1} parent=5 // pred_check
        _
      $region34: #{tpu_custom_call.1} parent=5 // pred_check_branch
        %199 = sbr.rel (%p196) target = $region36
      $region35: #{tpu_custom_call.1} parent=5 // pred_region
        %s200 = ssub.s32 %s18, 1
        %p201 = scmp.lt.s32.totalorder %s23, 1
        %s202 = scalar_select %p201, %s23, 1
        %s203 = smul.addr %s202, 8
        %s204 = scalar_lea.vmem %s0, %s203
        %p205 = pneg %p44
        %p206 = pneg %p41
        %p207 = pneg %p65
        %p208 = pneg %p62
        %p209 = pneg %p86
        %p210 = pneg %p83
        %p211 = pneg %p107
        %p212 = pneg %p104
        %p213 = pneg %p133
        %p214 = pneg %p130
        %s215 = sand.u32 %s120, 1
        %s216 = scalar_lea.sflag [#allocation3], %s215
        %s217 = sand.u32 %s120, 1
        %s218 = smul.addr %s217, 8
        %s219 = scalar_lea.vmem [#allocation2], %s218
        %p220 = pneg %p159
        %p221 = pneg %p156
        %s222 = sand.u32 %s146, 1
        %s223 = scalar_lea.sflag [#allocation5], %s222
        %s224 = sand.u32 %s146, 1
        %s225 = smul.addr %s224, 32
        %s226 = scalar_lea.vmem [#allocation4], %s225
        %p227 = scmp.lt.s32.totalorder %s23, 1
        %s228 = scalar_select %p227, %s23, 1
        %s229 = smul.addr %s228, 8
        %s230 = scalar_lea.vmem %s0, %s229
        %v231 = vld [vmem:[%s230] sm:$0xff]
        %v232 = vld [vmem:[%s1] sm:$0xff]
        %v233 = vld [vmem:[%s1 + $0x8] sm:$0xff]
        %v234 = vld [vmem:[%s1 + $0x10] sm:$0xff]
        %v235 = vld [vmem:[%s1 + $0x18] sm:$0xff]
        %v236 = vld [vmem:[%s1 + $0x20] sm:$0xff]
        %v237 = vld [vmem:[%s1 + $0x28] sm:$0xff]
        %v238 = vld [vmem:[%s1 + $0x30] sm:$0xff]
        %v239 = vld [vmem:[%s1 + $0x38] sm:$0xff]
        %v240 = vld [vmem:[%s1 + $0x40] sm:$0xff]
        %v241 = vld [vmem:[%s1 + $0x48] sm:$0xff]
        %v242 = vld [vmem:[%s1 + $0x50] sm:$0xff]
        %v243 = vld [vmem:[%s1 + $0x58] sm:$0xff]
        %v244 = vld [vmem:[%s1 + $0x60] sm:$0xff]
        %v245 = vld [vmem:[%s1 + $0x68] sm:$0xff]
        %v246 = vld [vmem:[%s1 + $0x70] sm:$0xff]
        %v247 = vld [vmem:[%s1 + $0x78] sm:$0xff]
        %vm248 = vcmask 261120
        %v250 = vsel %vm248, %v231, 0
        %252 = vmatpush.msra.mxu0 0.0
        %253 = vmatpush.msra.mxu0 0.0
        %254 = vmatpush.msra.mxu0 0.0
        %255 = vmatpush.msra.mxu0 0.0
        %256 = vmatpush.msra.mxu0 0.0
        %257 = vmatpush.msra.mxu0 0.0
        %258 = vmatpush.msra.mxu0 0.0
        %259 = vmatpush.msra.mxu0 0.0
        %260 = vmatpush.msra.mxu0 0.0
        %261 = vmatpush.msra.mxu0 0.0
        %262 = vmatpush.msra.mxu0 0.0
        %263 = vmatpush.msra.mxu0 0.0
        %264 = vmatpush.msra.mxu0 %v235
        %265 = vmatpush.msra.mxu0 %v234
        %266 = vmatpush.msra.mxu0 %v233
        %267 = vmatpush.msra.mxu0 %v232
        %268 = vmatmul.f32.gmra.mxu0 %v250
        %v269 = vpop.f32.mrf.mxu0
        %v270 = vadd.f32 0.0, %v269
        %271 = vdwg.mxu0
        %272 = vmatpush.msra.mxu0 0.0
        %273 = vmatpush.msra.mxu0 0.0
        %274 = vmatpush.msra.mxu0 0.0
        %275 = vmatpush.msra.mxu0 0.0
        %276 = vmatpush.msra.mxu0 0.0
        %277 = vmatpush.msra.mxu0 0.0
        %278 = vmatpush.msra.mxu0 0.0
        %279 = vmatpush.msra.mxu0 0.0
        %280 = vmatpush.msra.mxu0 0.0
        %281 = vmatpush.msra.mxu0 0.0
        %282 = vmatpush.msra.mxu0 0.0
        %283 = vmatpush.msra.mxu0 0.0
        %284 = vmatpush.msra.mxu0 %v239
        %285 = vmatpush.msra.mxu0 %v238
        %286 = vmatpush.msra.mxu0 %v237
        %287 = vmatpush.msra.mxu0 %v236
        %288 = vmatmul.f32.gmra.mxu0 %v250
        %v289 = vpop.f32.mrf.mxu0
        %v290 = vadd.f32 0.0, %v289
        %291 = vdwg.mxu0
        %292 = vmatpush.msra.mxu0 0.0
        %293 = vmatpush.msra.mxu0 0.0
        %294 = vmatpush.msra.mxu0 0.0
        %295 = vmatpush.msra.mxu0 0.0
        %296 = vmatpush.msra.mxu0 0.0
        %297 = vmatpush.msra.mxu0 0.0
        %298 = vmatpush.msra.mxu0 0.0
        %299 = vmatpush.msra.mxu0 0.0
        %300 = vmatpush.msra.mxu0 0.0
        %301 = vmatpush.msra.mxu0 0.0
        %302 = vmatpush.msra.mxu0 0.0
        %303 = vmatpush.msra.mxu0 0.0
        %304 = vmatpush.msra.mxu0 %v243
        %305 = vmatpush.msra.mxu0 %v242
        %306 = vmatpush.msra.mxu0 %v241
        %307 = vmatpush.msra.mxu0 %v240
        %308 = vmatmul.f32.gmra.mxu0 %v250
        %v309 = vpop.f32.mrf.mxu0
        %v310 = vadd.f32 0.0, %v309
        %311 = vdwg.mxu0
        %312 = vmatpush.msra.mxu0 0.0
        %313 = vmatpush.msra.mxu0 0.0
        %314 = vmatpush.msra.mxu0 0.0
        %315 = vmatpush.msra.mxu0 0.0
        %316 = vmatpush.msra.mxu0 0.0
        %317 = vmatpush.msra.mxu0 0.0
        %318 = vmatpush.msra.mxu0 0.0
        %319 = vmatpush.msra.mxu0 0.0
        %320 = vmatpush.msra.mxu0 0.0
        %321 = vmatpush.msra.mxu0 0.0
        %322 = vmatpush.msra.mxu0 0.0
        %323 = vmatpush.msra.mxu0 0.0
        %324 = vmatpush.msra.mxu0 %v247
        %325 = vmatpush.msra.mxu0 %v246
        %326 = vmatpush.msra.mxu0 %v245
        %327 = vmatpush.msra.mxu0 %v244
        %328 = vmatmul.f32.gmra.mxu0 %v250
        %v329 = vpop.f32.mrf.mxu0
        %v330 = vadd.f32 0.0, %v329
        %331 = vdwg.mxu0
        %v332 = vld [vmem:[%s3] sm:$0xff]
        %v333 = vld [vmem:[%s3 + $0x8] sm:$0xff]
        %v334 = vld [vmem:[%s3 + $0x10] sm:$0xff]
        %v335 = vld [vmem:[%s3 + $0x18] sm:$0xff]
        %337 = vrot.lane.b32.xlu0 %v270, 120
        %v338 = vpop.permute.xlu0 %337
        %vm339 = vcmask 64512
        %v340 = vsel %vm339, %v270, 0
        %v342 = vsel %vm339, %v338, 0
        %344 = vmatpush.xpose.msra.mxu0 0.0
        %345 = vmatpush.xpose.msra.mxu0 0.0
        %346 = vmatpush.xpose.msra.mxu0 0.0
        %347 = vmatpush.xpose.msra.mxu0 0.0
        %348 = vmatpush.xpose.msra.mxu0 0.0
        %349 = vmatpush.xpose.msra.mxu0 0.0
        %350 = vmatpush.xpose.msra.mxu0 0.0
        %351 = vmatpush.xpose.msra.mxu0 0.0
        %352 = vmatpush.xpose.msra.mxu0 0.0
        %353 = vmatpush.xpose.msra.mxu0 0.0
        %354 = vmatpush.xpose.msra.mxu0 0.0
        %355 = vmatpush.xpose.msra.mxu0 0.0
        %356 = vmatpush.xpose.msra.mxu0 0.0
        %357 = vmatpush.xpose.msra.mxu0 0.0
        %358 = vmatpush.xpose.msra.mxu0 0.0
        %359 = vmatpush.xpose.msra.mxu0 %v342
        %360 = vmatmul.f32.gmra.mxu0 %v340
        %v361 = vpop.f32.mrf.mxu0
        %v362 = vadd.f32 %v332, %v361
        %363 = vdwg.mxu0
        %365 = vrot.lane.b32.xlu0 %v290, 120
        %v366 = vpop.permute.xlu0 %365
        %v367 = vsel %vm339, %v290, 0
        %v369 = vsel %vm339, %v366, 0
        %371 = vmatpush.xpose.msra.mxu0 0.0
        %372 = vmatpush.xpose.msra.mxu0 0.0
        %373 = vmatpush.xpose.msra.mxu0 0.0
        %374 = vmatpush.xpose.msra.mxu0 0.0
        %375 = vmatpush.xpose.msra.mxu0 0.0
        %376 = vmatpush.xpose.msra.mxu0 0.0
        %377 = vmatpush.xpose.msra.mxu0 0.0
        %378 = vmatpush.xpose.msra.mxu0 0.0
        %379 = vmatpush.xpose.msra.mxu0 0.0
        %380 = vmatpush.xpose.msra.mxu0 0.0
        %381 = vmatpush.xpose.msra.mxu0 0.0
        %382 = vmatpush.xpose.msra.mxu0 0.0
        %383 = vmatpush.xpose.msra.mxu0 0.0
        %384 = vmatpush.xpose.msra.mxu0 0.0
        %385 = vmatpush.xpose.msra.mxu0 0.0
        %386 = vmatpush.xpose.msra.mxu0 %v369
        %387 = vmatmul.f32.gmra.mxu0 %v367
        %v388 = vpop.f32.mrf.mxu0
        %v389 = vadd.f32 %v333, %v388
        %390 = vdwg.mxu0
        %392 = vrot.lane.b32.xlu0 %v310, 120
        %v393 = vpop.permute.xlu0 %392
        %v394 = vsel %vm339, %v310, 0
        %v396 = vsel %vm339, %v393, 0
        %398 = vmatpush.xpose.msra.mxu0 0.0
        %399 = vmatpush.xpose.msra.mxu0 0.0
        %400 = vmatpush.xpose.msra.mxu0 0.0
        %401 = vmatpush.xpose.msra.mxu0 0.0
        %402 = vmatpush.xpose.msra.mxu0 0.0
        %403 = vmatpush.xpose.msra.mxu0 0.0
        %404 = vmatpush.xpose.msra.mxu0 0.0
        %405 = vmatpush.xpose.msra.mxu0 0.0
        %406 = vmatpush.xpose.msra.mxu0 0.0
        %407 = vmatpush.xpose.msra.mxu0 0.0
        %408 = vmatpush.xpose.msra.mxu0 0.0
        %409 = vmatpush.xpose.msra.mxu0 0.0
        %410 = vmatpush.xpose.msra.mxu0 0.0
        %411 = vmatpush.xpose.msra.mxu0 0.0
        %412 = vmatpush.xpose.msra.mxu0 0.0
        %413 = vmatpush.xpose.msra.mxu0 %v396
        %414 = vmatmul.f32.gmra.mxu0 %v394
        %v415 = vpop.f32.mrf.mxu0
        %v416 = vadd.f32 %v334, %v415
        %417 = vdwg.mxu0
        %419 = vrot.lane.b32.xlu0 %v330, 120
        %v420 = vpop.permute.xlu0 %419
        %v421 = vsel %vm339, %v330, 0
        %v423 = vsel %vm339, %v420, 0
        %425 = vmatpush.xpose.msra.mxu0 0.0
        %426 = vmatpush.xpose.msra.mxu0 0.0
        %427 = vmatpush.xpose.msra.mxu0 0.0
        %428 = vmatpush.xpose.msra.mxu0 0.0
        %429 = vmatpush.xpose.msra.mxu0 0.0
        %430 = vmatpush.xpose.msra.mxu0 0.0
        %431 = vmatpush.xpose.msra.mxu0 0.0
        %432 = vmatpush.xpose.msra.mxu0 0.0
        %433 = vmatpush.xpose.msra.mxu0 0.0
        %434 = vmatpush.xpose.msra.mxu0 0.0
        %435 = vmatpush.xpose.msra.mxu0 0.0
        %436 = vmatpush.xpose.msra.mxu0 0.0
        %437 = vmatpush.xpose.msra.mxu0 0.0
        %438 = vmatpush.xpose.msra.mxu0 0.0
        %439 = vmatpush.xpose.msra.mxu0 0.0
        %440 = vmatpush.xpose.msra.mxu0 %v423
        %441 = vmatmul.f32.gmra.mxu0 %v421
        %v442 = vpop.f32.mrf.mxu0
        %v443 = vadd.f32 %v335, %v442
        %444 = vdwg.mxu0
        %v445 = vsel %vm339, %v362, -inf
        %446 = vmax.xlane.f32.xlu0 %v445
        %v447 = vpop.xlane.xlu0 %446
        %v448 = vsel %vm339, %v389, -inf
        %449 = vmax.xlane.f32.xlu0 %v448
        %v450 = vpop.xlane.xlu0 %449
        %v451 = vsel %vm339, %v416, -inf
        %452 = vmax.xlane.f32.xlu0 %v451
        %v453 = vpop.xlane.xlu0 %452
        %v454 = vsel %vm339, %v443, -inf
        %455 = vmax.xlane.f32.xlu0 %v454
        %v456 = vpop.xlane.xlu0 %455
        %v457 = vsub.f32 %v362, %v447
        %v458 = vsub.f32 %v389, %v450
        %v459 = vsub.f32 %v416, %v453
        %v460 = vsub.f32 %v443, %v456
        %v461 = vmul.f32 %v457, 1.442695
        %v462 = vpow.pop %v461
        %v463 = vmul.f32 %v458, 1.442695
        %v464 = vpow.pop %v463
        %v465 = vmul.f32 %v459, 1.442695
        %v466 = vpow.pop %v465
        %v467 = vmul.f32 %v460, 1.442695
        %v468 = vpow.pop %v467
        %v469 = vsel %vm339, %v462, 0.0
        %470 = vadd.xlane.f32.xlu0 %v469
        %v471 = vpop.xlane.xlu0 %470
        %v472 = vsel %vm339, %v464, 0.0
        %473 = vadd.xlane.f32.xlu0 %v472
        %v474 = vpop.xlane.xlu0 %473
        %v475 = vsel %vm339, %v466, 0.0
        %476 = vadd.xlane.f32.xlu0 %v475
        %v477 = vpop.xlane.xlu0 %476
        %v478 = vsel %vm339, %v468, 0.0
        %479 = vadd.xlane.f32.xlu0 %v478
        %v480 = vpop.xlane.xlu0 %479
        %v481 = vrcp.pop %v471
        %v482 = vmul.f32 %v471, %v481
        %v483 = vsub.f32 1.0, %v482
        %v484 = vmul.f32 %v481, %v483
        %v485 = vadd.f32 %v481, %v484
        %vm486 = vweird.f32 %v471
        %vm487 = vweird.f32 %v481
        %vm488 = vmor %vm486, %vm487
        %v489 = vsel %vm488, %v481, %v485
        %v490 = vand.u32 2147483647, %v471
        %vm491 = vcmp.eq.f32.partialorder %v490, 8.507059e+37
        %v492 = vand.u32 %v471, 2147483648
        %v493 = vor.u32 1.1754944e-38, %v492
        %v494 = vsel %vm491, %v493, %v489
        %v495 = vrcp.pop %v474
        %v496 = vmul.f32 %v474, %v495
        %v497 = vsub.f32 1.0, %v496
        %v498 = vmul.f32 %v495, %v497
        %v499 = vadd.f32 %v495, %v498
        %vm500 = vweird.f32 %v474
        %vm501 = vweird.f32 %v495
        %vm502 = vmor %vm500, %vm501
        %v503 = vsel %vm502, %v495, %v499
        %v504 = vand.u32 2147483647, %v474
        %vm505 = vcmp.eq.f32.partialorder %v504, 8.507059e+37
        %v506 = vand.u32 %v474, 2147483648
        %v507 = vor.u32 1.1754944e-38, %v506
        %v508 = vsel %vm505, %v507, %v503
        %v509 = vrcp.pop %v477
        %v510 = vmul.f32 %v477, %v509
        %v511 = vsub.f32 1.0, %v510
        %v512 = vmul.f32 %v509, %v511
        %v513 = vadd.f32 %v509, %v512
        %vm514 = vweird.f32 %v477
        %vm515 = vweird.f32 %v509
        %vm516 = vmor %vm514, %vm515
        %v517 = vsel %vm516, %v509, %v513
        %v518 = vand.u32 2147483647, %v477
        %vm519 = vcmp.eq.f32.partialorder %v518, 8.507059e+37
        %v520 = vand.u32 %v477, 2147483648
        %v521 = vor.u32 1.1754944e-38, %v520
        %v522 = vsel %vm519, %v521, %v517
        %v523 = vrcp.pop %v480
        %v524 = vmul.f32 %v480, %v523
        %v525 = vsub.f32 1.0, %v524
        %v526 = vmul.f32 %v523, %v525
        %v527 = vadd.f32 %v523, %v526
        %vm528 = vweird.f32 %v480
        %vm529 = vweird.f32 %v523
        %vm530 = vmor %vm528, %vm529
        %v531 = vsel %vm530, %v523, %v527
        %v532 = vand.u32 2147483647, %v480
        %vm533 = vcmp.eq.f32.partialorder %v532, 8.507059e+37
        %v534 = vand.u32 %v480, 2147483648
        %v535 = vor.u32 1.1754944e-38, %v534
        %v536 = vsel %vm533, %v535, %v531
        %v537 = vmul.f32 %v462, %v494
        %v538 = vmul.f32 %v464, %v508
        %v539 = vmul.f32 %v466, %v522
        %v540 = vmul.f32 %v468, %v536
        %541 = vst.msk [vmem:[%s226] sm:$0xff] %vm339, %v537
        %542 = vst.msk [vmem:[%s226 + $0x8] sm:$0xff] %vm339, %v538
        %543 = vst.msk [vmem:[%s226 + $0x10] sm:$0xff] %vm339, %v539
        %544 = vst.msk [vmem:[%s226 + $0x18] sm:$0xff] %vm339, %v540
        %545 = vrot.lane.b32.xlu0 %v270, 112
        %v546 = vpop.permute.xlu0 %545
        %v549 = vsel %vm339, %v537, 0
        %551 = vmatpush.msra.mxu0 0.0
        %552 = vmatpush.msra.mxu0 0.0
        %553 = vmatpush.msra.mxu0 0.0
        %554 = vmatpush.msra.mxu0 0.0
        %555 = vmatpush.msra.mxu0 0.0
        %556 = vmatpush.msra.mxu0 0.0
        %557 = vmatpush.msra.mxu0 0.0
        %558 = vmatpush.msra.mxu0 0.0
        %559 = vmatpush.msra.mxu0 0.0
        %560 = vmatpush.msra.mxu0 0.0
        %561 = vmatpush.msra.mxu0 0.0
        %562 = vmatpush.msra.mxu0 0.0
        %563 = vmatpush.msra.mxu0 0.0
        %564 = vmatpush.msra.mxu0 0.0
        %565 = vmatpush.msra.mxu0 0.0
        %566 = vmatpush.msra.mxu0 %v546
        %567 = vmatmul.f32.gmra.mxu0 %v549
        %v568 = vpop.f32.mrf.mxu0
        %v569 = vadd.f32 0.0, %v568
        %570 = vdwg.mxu0
        %571 = vrot.lane.b32.xlu0 %v290, 112
        %v572 = vpop.permute.xlu0 %571
        %v575 = vsel %vm339, %v538, 0
        %577 = vmatpush.msra.mxu0 0.0
        %578 = vmatpush.msra.mxu0 0.0
        %579 = vmatpush.msra.mxu0 0.0
        %580 = vmatpush.msra.mxu0 0.0
        %581 = vmatpush.msra.mxu0 0.0
        %582 = vmatpush.msra.mxu0 0.0
        %583 = vmatpush.msra.mxu0 0.0
        %584 = vmatpush.msra.mxu0 0.0
        %585 = vmatpush.msra.mxu0 0.0
        %586 = vmatpush.msra.mxu0 0.0
        %587 = vmatpush.msra.mxu0 0.0
        %588 = vmatpush.msra.mxu0 0.0
        %589 = vmatpush.msra.mxu0 0.0
        %590 = vmatpush.msra.mxu0 0.0
        %591 = vmatpush.msra.mxu0 0.0
        %592 = vmatpush.msra.mxu0 %v572
        %593 = vmatmul.f32.gmra.mxu0 %v575
        %v594 = vpop.f32.mrf.mxu0
        %v595 = vadd.f32 0.0, %v594
        %596 = vdwg.mxu0
        %597 = vrot.lane.b32.xlu0 %v310, 112
        %v598 = vpop.permute.xlu0 %597
        %v601 = vsel %vm339, %v539, 0
        %603 = vmatpush.msra.mxu0 0.0
        %604 = vmatpush.msra.mxu0 0.0
        %605 = vmatpush.msra.mxu0 0.0
        %606 = vmatpush.msra.mxu0 0.0
        %607 = vmatpush.msra.mxu0 0.0
        %608 = vmatpush.msra.mxu0 0.0
        %609 = vmatpush.msra.mxu0 0.0
        %610 = vmatpush.msra.mxu0 0.0
        %611 = vmatpush.msra.mxu0 0.0
        %612 = vmatpush.msra.mxu0 0.0
        %613 = vmatpush.msra.mxu0 0.0
        %614 = vmatpush.msra.mxu0 0.0
        %615 = vmatpush.msra.mxu0 0.0
        %616 = vmatpush.msra.mxu0 0.0
        %617 = vmatpush.msra.mxu0 0.0
        %618 = vmatpush.msra.mxu0 %v598
        %619 = vmatmul.f32.gmra.mxu0 %v601
        %v620 = vpop.f32.mrf.mxu0
        %v621 = vadd.f32 0.0, %v620
        %622 = vdwg.mxu0
        %623 = vrot.lane.b32.xlu0 %v330, 112
        %v624 = vpop.permute.xlu0 %623
        %v627 = vsel %vm339, %v540, 0
        %629 = vmatpush.msra.mxu0 0.0
        %630 = vmatpush.msra.mxu0 0.0
        %631 = vmatpush.msra.mxu0 0.0
        %632 = vmatpush.msra.mxu0 0.0
        %633 = vmatpush.msra.mxu0 0.0
        %634 = vmatpush.msra.mxu0 0.0
        %635 = vmatpush.msra.mxu0 0.0
        %636 = vmatpush.msra.mxu0 0.0
        %637 = vmatpush.msra.mxu0 0.0
        %638 = vmatpush.msra.mxu0 0.0
        %639 = vmatpush.msra.mxu0 0.0
        %640 = vmatpush.msra.mxu0 0.0
        %641 = vmatpush.msra.mxu0 0.0
        %642 = vmatpush.msra.mxu0 0.0
        %643 = vmatpush.msra.mxu0 0.0
        %644 = vmatpush.msra.mxu0 %v624
        %645 = vmatmul.f32.gmra.mxu0 %v627
        %v646 = vpop.f32.mrf.mxu0
        %v647 = vadd.f32 0.0, %v646
        %648 = vdwg.mxu0
        %v649 = vld [vmem:[%s2] sm:$0xff]
        %v650 = vld [vmem:[%s2 + $0x8] sm:$0xff]
        %v651 = vld [vmem:[%s2 + $0x10] sm:$0xff]
        %v652 = vld [vmem:[%s2 + $0x18] sm:$0xff]
        %v654 = vsel %vm339, %v569, 0
        %656 = vmatpush.msra.mxu0 0.0
        %657 = vmatpush.msra.mxu0 0.0
        %658 = vmatpush.msra.mxu0 0.0
        %659 = vmatpush.msra.mxu0 0.0
        %660 = vmatpush.msra.mxu0 0.0
        %661 = vmatpush.msra.mxu0 0.0
        %662 = vmatpush.msra.mxu0 0.0
        %663 = vmatpush.msra.mxu0 0.0
        %664 = vmatpush.msra.mxu0 0.0
        %665 = vmatpush.msra.mxu0 0.0
        %666 = vmatpush.msra.mxu0 0.0
        %667 = vmatpush.msra.mxu0 0.0
        %668 = vmatpush.msra.mxu0 0.0
        %669 = vmatpush.msra.mxu0 0.0
        %670 = vmatpush.msra.mxu0 0.0
        %671 = vmatpush.msra.mxu0 %v649
        %672 = vmatmul.f32.gmra.mxu0 %v654
        %v673 = vpop.f32.mrf.mxu0
        %v674 = vadd.f32 0.0, %v673
        %675 = vdwg.mxu0
        %v677 = vsel %vm339, %v595, 0
        %679 = vmatpush.msra.mxu0 0.0
        %680 = vmatpush.msra.mxu0 0.0
        %681 = vmatpush.msra.mxu0 0.0
        %682 = vmatpush.msra.mxu0 0.0
        %683 = vmatpush.msra.mxu0 0.0
        %684 = vmatpush.msra.mxu0 0.0
        %685 = vmatpush.msra.mxu0 0.0
        %686 = vmatpush.msra.mxu0 0.0
        %687 = vmatpush.msra.mxu0 0.0
        %688 = vmatpush.msra.mxu0 0.0
        %689 = vmatpush.msra.mxu0 0.0
        %690 = vmatpush.msra.mxu0 0.0
        %691 = vmatpush.msra.mxu0 0.0
        %692 = vmatpush.msra.mxu0 0.0
        %693 = vmatpush.msra.mxu0 0.0
        %694 = vmatpush.msra.mxu0 %v650
        %695 = vmatmul.f32.gmra.mxu0 %v677
        %v696 = vpop.f32.mrf.mxu0
        %v697 = vadd.f32 0.0, %v696
        %698 = vdwg.mxu0
        %v700 = vsel %vm339, %v621, 0
        %702 = vmatpush.msra.mxu0 0.0
        %703 = vmatpush.msra.mxu0 0.0
        %704 = vmatpush.msra.mxu0 0.0
        %705 = vmatpush.msra.mxu0 0.0
        %706 = vmatpush.msra.mxu0 0.0
        %707 = vmatpush.msra.mxu0 0.0
        %708 = vmatpush.msra.mxu0 0.0
        %709 = vmatpush.msra.mxu0 0.0
        %710 = vmatpush.msra.mxu0 0.0
        %711 = vmatpush.msra.mxu0 0.0
        %712 = vmatpush.msra.mxu0 0.0
        %713 = vmatpush.msra.mxu0 0.0
        %714 = vmatpush.msra.mxu0 0.0
        %715 = vmatpush.msra.mxu0 0.0
        %716 = vmatpush.msra.mxu0 0.0
        %717 = vmatpush.msra.mxu0 %v651
        %718 = vmatmul.f32.gmra.mxu0 %v700
        %v719 = vpop.f32.mrf.mxu0
        %v720 = vadd.f32 0.0, %v719
        %721 = vdwg.mxu0
        %v723 = vsel %vm339, %v647, 0
        %725 = vmatpush.msra.mxu0 0.0
        %726 = vmatpush.msra.mxu0 0.0
        %727 = vmatpush.msra.mxu0 0.0
        %728 = vmatpush.msra.mxu0 0.0
        %729 = vmatpush.msra.mxu0 0.0
        %730 = vmatpush.msra.mxu0 0.0
        %731 = vmatpush.msra.mxu0 0.0
        %732 = vmatpush.msra.mxu0 0.0
        %733 = vmatpush.msra.mxu0 0.0
        %734 = vmatpush.msra.mxu0 0.0
        %735 = vmatpush.msra.mxu0 0.0
        %736 = vmatpush.msra.mxu0 0.0
        %737 = vmatpush.msra.mxu0 0.0
        %738 = vmatpush.msra.mxu0 0.0
        %739 = vmatpush.msra.mxu0 0.0
        %740 = vmatpush.msra.mxu0 %v652
        %741 = vmatmul.f32.gmra.mxu0 %v723
        %v742 = vpop.f32.mrf.mxu0
        %v743 = vadd.f32 0.0, %v742
        %744 = vdwg.mxu0
        %v745 = vsel %vm248, %v674, 0.0
        %v746 = vsel %vm248, %v697, 0.0
        %v747 = vadd.f32 %v745, %v746
        %v748 = vsel %vm248, %v720, 0.0
        %v749 = vadd.f32 %v747, %v748
        %v750 = vsel %vm248, %v743, 0.0
        %v751 = vadd.f32 %v749, %v750
        %752 = vst.msk [vmem:[%s219] sm:$0xff] %vm248, %v751
        %s753 = sand.u32 %s120, 1
        %s754 = scalar_lea.sflag [#allocation3], %s753
        %s755 = sand.u32 %s120, 1
        %s756 = smul.addr %s755, 8
        %s757 = scalar_lea.vmem [#allocation2], %s756
        %s758 = sand.u32 %s146, 1
        %s759 = scalar_lea.sflag [#allocation5], %s758
        %s760 = sand.u32 %s146, 1
        %s761 = smul.addr %s760, 32
        %s762 = scalar_lea.vmem [#allocation4], %s761
        // Predicated region
        $region37: #{tpu_custom_call.1} parent=35 // pred_check
          %p763 = pneg %p130
        $region38: #{tpu_custom_call.1} parent=35 // pred_check_branch
          %765 = sbr.rel (%p763) target = $region40
        $region39: #{tpu_custom_call.1} parent=35 // pred_region
          %767 = vsyncadd %s754, 0
          %s768 = smul.addr %s23, 8
          %s769 = scalar_lea.hbm %s4, %s768
          %s771 = sshll.u32 %s757, 4
          %s772 = int_to_ptr.vmem [resolvable:$true] %s771
          %s773 = sshll.u32 %s769, 4
          %s774 = int_to_ptr.hbm [resolvable:$true] %s773
          %776 = dma.vmem_to_hbm [thread:$0]  %s772, 128, %s774, %s754
        $region40: #{tpu_custom_call.1} parent=35 // pred_fallthru
          _
        // Predicated region
        $region41: #{tpu_custom_call.1} parent=35 // pred_check
          %p777 = pneg %p156
        $region42: #{tpu_custom_call.1} parent=35 // pred_check_branch
          %779 = sbr.rel (%p777) target = $region44
        $region43: #{tpu_custom_call.1} parent=35 // pred_region
          %781 = vsyncadd %s759, 0
          %s782 = smul.addr %s23, 4
          %s783 = smul.addr %s782, 8
          %s784 = scalar_lea.hbm %s5, %s783
          %s785 = sshll.u32 %s762, 4
          %s786 = int_to_ptr.vmem [resolvable:$true] %s785
          %s787 = sshll.u32 %s784, 4
          %s788 = int_to_ptr.hbm [resolvable:$true] %s787
          %793 = dma.vmem_to_hbm [thread:$0]  %s786, 512, %s788, %s759, 128, 128, 8
        $region44: #{tpu_custom_call.1} parent=35 // pred_fallthru
          _
      $region36: #{tpu_custom_call.1} parent=5 // pred_fallthru
        _
      %p794 = scmp.le.s32.totalorder 2, %s18
      // Predicated region
      $region45: #{tpu_custom_call.1} parent=5 // pred_check
        %p795 = pneg %p794
      $region46: #{tpu_custom_call.1} parent=5 // pred_check_branch
        %797 = sbr.rel (%p795) target = $region48
      $region47: #{tpu_custom_call.1} parent=5 // pred_region
        %s798 = ssub.s32 %s18, 2
        // Predicated region
        $region49: #{tpu_custom_call.1} parent=47 // pred_check
          %p799 = pneg %p136
        $region50: #{tpu_custom_call.1} parent=47 // pred_check_branch
          %801 = sbr.rel (%p799) target = $region52
        $region51: #{tpu_custom_call.1} parent=47 // pred_region
          %s802 = sand.u32 %s121, 1
          %s803 = scalar_lea.sflag [#allocation3], %s802
          %s804 = sand.u32 %s121, 1
          %s805 = smul.addr %s804, 8
          %s806 = scalar_lea.vmem [#allocation2], %s805
          %808 = dma.done %s803, 128
        $region52: #{tpu_custom_call.1} parent=47 // pred_fallthru
          _
        // Predicated region
        $region53: #{tpu_custom_call.1} parent=47 // pred_check
          %p809 = pneg %p162
        $region54: #{tpu_custom_call.1} parent=47 // pred_check_branch
          %811 = sbr.rel (%p809) target = $region56
        $region55: #{tpu_custom_call.1} parent=47 // pred_region
          %s812 = sand.u32 %s147, 1
          %s813 = scalar_lea.sflag [#allocation5], %s812
          %s814 = sand.u32 %s147, 1
          %s815 = smul.addr %s814, 32
          %s816 = scalar_lea.vmem [#allocation4], %s815
          %818 = dma.done %s813, 512
        $region56: #{tpu_custom_call.1} parent=47 // pred_fallthru
          _
      $region48: #{tpu_custom_call.1} parent=5 // pred_fallthru
        _
    $region6: #{tpu_custom_call.1} parent=1 // loop_footer
      %s22 = sadd.s32 1, %s18
    $region7: #{tpu_custom_call.1} parent=1 // loop_footer_branch
      %17 = sbr.rel target = $region3
    $region8: #{tpu_custom_call.1} parent=1 // loop_exit
      _
    %819 = vsyncpa [#allocation3], 1
    %s820 = scalar_lea.sflag [#allocation3], 1
    %821 = vsyncpa %s820, 1
    %822 = vsyncpa [#allocation5], 1
    %s823 = scalar_lea.sflag [#allocation5], 1
    %824 = vsyncpa %s823, 1

</llo_original>
